<compile_context>
chip_gen: v7x
topology: tpu7x:2x2x1
jax: 0.10.0
libtpu: 0.0.40
codegen_flags: <defaults>
</compile_context>

<pallas_src>
import jax
import jax.numpy as jnp
from jax.experimental import pallas as pl
from jax.experimental.pallas import tpu as pltpu


def nested_nxd_kernel(x_ref, t_ref, p_ref, o_ref):
    # Packed params:
    #   rows  0:20 = block-diagonal folded weight (two 10x10 copies of W_fold)
    #   row   20   = folded bias tiled twice (lanes 0:10 and 10:20)
    #   row   21   = w4[:, 0] in lanes 0:2
    #   row   22   = w4[:, 1] in lanes 0:2
    #   row   23   = b4 in lanes 0:2
    W = p_ref[0:20, :]                     # (20, 20)
    b = p_ref[20:21, :]                    # (1, 20)
    c0 = p_ref[21:22, 0:2]                 # (1, 2)
    c1 = p_ref[22:23, 0:2]                 # (1, 2)
    b4 = p_ref[23:24, 0:2]                 # (1, 2)

    # Single MXU push covers both sequence positions (block-diagonal weight).
    h = jnp.dot(x_ref[...], W, preferred_element_type=jnp.float32) + b  # (TB, 20)
    t = t_ref[...]                                                      # (TB, 2) i32

    def token_loss(logits, tgt):
        # Stable logsumexp (exp/log on the EUP, co-issues with MXU/VPU).
        m = jnp.max(logits, axis=-1, keepdims=True)
        lse = m + jnp.log(jnp.sum(jnp.exp(logits - m), axis=-1, keepdims=True))
        # Target-logit selection via iota compare (no materialized one-hot).
        cols = jax.lax.broadcasted_iota(jnp.int32, logits.shape, 1)
        tl = jnp.sum(jnp.where(cols == tgt, logits, 0.0), axis=-1, keepdims=True)
        return lse - tl                                                 # (TB, 1)

    loss0 = token_loss(h[:, 0:10], t[:, 0:1])
    loss1 = token_loss(h[:, 10:20], t[:, 1:2])
    # nn.Linear(2,2) as broadcast FMAs: (TB,1)*(1,2) + (TB,1)*(1,2) + (1,2).
    o_ref[...] = loss0 * c0 + loss1 * c1 + b4


def nested_nxd_forward(x, params, targets):
    B, S, F = x.shape
    assert S == 2 and F == 10

    # ---- fold the two 10x10 linears (exact: no nonlinearity between them) ----
    W_fold = (params["w_rpl"].T @ params["w_cpl"].T).astype(jnp.float32)   # (10,10)
    b_fold = (params["b_rpl"] @ params["w_cpl"].T
              + params["b_cpl"]).astype(jnp.float32)                       # (10,)
    w4, b4 = params["w4"], params["b4"]

    # ---- pack params: block-diagonal (20,20) W + tiled bias + 2x2 head ----
    pbuf = jnp.zeros((24, 2 * F), jnp.float32)
    pbuf = pbuf.at[0:F, 0:F].set(W_fold)
    pbuf = pbuf.at[F:2 * F, F:2 * F].set(W_fold)
    pbuf = pbuf.at[20, 0:F].set(b_fold)
    pbuf = pbuf.at[20, F:2 * F].set(b_fold)
    pbuf = pbuf.at[21, 0:2].set(w4[:, 0].astype(jnp.float32))
    pbuf = pbuf.at[22, 0:2].set(w4[:, 1].astype(jnp.float32))
    pbuf = pbuf.at[23, 0:2].set(b4.astype(jnp.float32))

    # ---- single operands: free reshape of x, merged int32 targets ----
    x2 = x.reshape(B, S * F).astype(jnp.float32)   # (B, 20), contiguous reshape
    t2 = targets.astype(jnp.int32)                 # (B, 2)

    # ---- row tiling over the batch dim; no wrapper-side padding ----
    # B <= 1024: one full-array block (block dims == array dims, always legal).
    # B  > 1024: 1024-row blocks (mult. of 8); partial tail block is masked on
    #            store, and the grid has >= 2 steps so v7x can use both TCs.
    TB = 1024 if B > 1024 else B
    grid = (pl.cdiv(B, TB),)

    out = pl.pallas_call(
        nested_nxd_kernel,
        out_shape=jax.ShapeDtypeStruct((B, 2), jnp.float32),
        grid=grid,
        in_specs=[
            pl.BlockSpec((TB, S * F), lambda i: (i, 0)),
            pl.BlockSpec((TB, S), lambda i: (i, 0)),
            pl.BlockSpec((24, S * F), lambda i: (0, 0)),   # params stay resident
        ],
        out_specs=pl.BlockSpec((TB, 2), lambda i: (i, 0)),
        compiler_params=pltpu.CompilerParams(
            dimension_semantics=("parallel",)),
    )(x2, t2, pbuf)
    return out


def reference_forward(x, params, targets):
    B, S, F = x.shape
    h = x.reshape(B * S, F) @ params["w_rpl"].T + params["b_rpl"]
    h = h @ params["w_cpl"].T + params["b_cpl"]
    lse = jax.nn.logsumexp(h, axis=-1)
    tl = jnp.take_along_axis(h, targets.reshape(-1, 1), axis=-1)[:, 0]
    loss = (lse - tl).reshape(B, S)
    return loss @ params["w4"].T + params["b4"]


def init_params(key):
    k = jax.random.split(key, 6)
    s10 = 1.0 / jnp.sqrt(10.0)
    s2 = 1.0 / jnp.sqrt(2.0)
    return {
        "w_rpl": jax.random.uniform(k[0], (10, 10), jnp.float32, -s10, s10),
        "b_rpl": jax.random.uniform(k[1], (10,), jnp.float32, -s10, s10),
        "w_cpl": jax.random.uniform(k[2], (10, 10), jnp.float32, -s10, s10),
        "b_cpl": jax.random.uniform(k[3], (10,), jnp.float32, -s10, s10),
        "w4":    jax.random.uniform(k[4], (2, 2), jnp.float32, -s2, s2),
        "b4":    jax.random.uniform(k[5], (2,), jnp.float32, -s2, s2),
    }


if __name__ == "__main__":
    key = jax.random.PRNGKey(0)
    kx, kp = jax.random.split(key)
    B, S, F = 4, 2, 10
    x = jax.random.normal(kx, (B, S, F), jnp.float32)
    params = init_params(kp)
    targets = (jnp.arange(B * S, dtype=jnp.int32) % F).reshape(B, S)

    out = nested_nxd_forward(x, params, targets)
    out = jax.block_until_ready(out)

    ref = reference_forward(x, params, targets)
    assert out.shape == (B, 2)
    assert jnp.allclose(out, ref, atol=1e-4, rtol=1e-4)
    print("KERNEL_OK")
</pallas_src>

<mosaic_0001>
module attributes {stable_mosaic.version = 11 : i64} {
  func.func @nested_nxd_kernel(%arg0: i32, %arg1: memref<4x20xf32, #tpu.memory_space<vmem>>, %arg2: memref<4x2xi32, #tpu.memory_space<vmem>>, %arg3: memref<24x20xf32, #tpu.memory_space<vmem>>, %arg4: memref<4x2xf32, #tpu.memory_space<vmem>>) attributes {dimension_semantics = [#tpu.dimension_semantics<parallel>], iteration_bounds = array<i64: 1>, scalar_prefetch = 0 : i64, scratch_operands = 0 : i64, tpu.core_type = #tpu.core_type<tc>, window_params = [{transform_indices = @transform_0, window_bounds = array<i64: 4, 20>}, {transform_indices = @transform_1, window_bounds = array<i64: 4, 2>}, {pipeline_mode = #tpu.pipeline_mode<synchronous>, transform_indices = @transform_2, window_bounds = array<i64: 24, 20>}, {transform_indices = @transform_3, window_bounds = array<i64: 4, 2>}]} {
    %c0 = arith.constant 0 : index
    %c0_0 = arith.constant 0 : index
    %0 = vector.load %arg3[%c0, %c0_0] : memref<24x20xf32, #tpu.memory_space<vmem>>, vector<20x20xf32>
    %c20 = arith.constant 20 : index
    %c0_1 = arith.constant 0 : index
    %1 = vector.load %arg3[%c20, %c0_1] : memref<24x20xf32, #tpu.memory_space<vmem>>, vector<1x20xf32>
    %c21 = arith.constant 21 : index
    %c0_2 = arith.constant 0 : index
    %2 = vector.load %arg3[%c21, %c0_2] : memref<24x20xf32, #tpu.memory_space<vmem>>, vector<1x2xf32>
    %c22 = arith.constant 22 : index
    %c0_3 = arith.constant 0 : index
    %3 = vector.load %arg3[%c22, %c0_3] : memref<24x20xf32, #tpu.memory_space<vmem>>, vector<1x2xf32>
    %c23 = arith.constant 23 : index
    %c0_4 = arith.constant 0 : index
    %4 = vector.load %arg3[%c23, %c0_4] : memref<24x20xf32, #tpu.memory_space<vmem>>, vector<1x2xf32>
    %c0_5 = arith.constant 0 : index
    %c0_6 = arith.constant 0 : index
    %5 = vector.load %arg1[%c0_5, %c0_6] : memref<4x20xf32, #tpu.memory_space<vmem>>, vector<4x20xf32>
    %cst = arith.constant dense<0.000000e+00> : vector<4x20xf32>
    %6 = tpu.matmul %5, %0, %cst {dimension_numbers = #tpu.dot_dimension_numbers<[1], [0], [0], [1], [0, 0, 1, 1], [], []>} : vector<4x20xf32>, vector<20x20xf32>, vector<4x20xf32> -> vector<4x20xf32>
    %7 = vector.broadcast %1 : vector<1x20xf32> to vector<4x20xf32>
    %8 = arith.addf %6, %7 : vector<4x20xf32>
    %c0_7 = arith.constant 0 : index
    %c0_8 = arith.constant 0 : index
    %9 = vector.load %arg2[%c0_7, %c0_8] : memref<4x2xi32, #tpu.memory_space<vmem>>, vector<4x2xi32>
    %10 = vector.extract_strided_slice %8 {offsets = [0, 0], sizes = [4, 10], strides = [1, 1]} : vector<4x20xf32> to vector<4x10xf32>
    %11 = vector.extract_strided_slice %9 {offsets = [0, 0], sizes = [4, 1], strides = [1, 1]} : vector<4x2xi32> to vector<4x1xi32>
    %cst_9 = arith.constant dense<0xFF800000> : vector<4xf32>
    %12 = vector.multi_reduction <maximumf>, %10, %cst_9 [1] : vector<4x10xf32> to vector<4xf32>
    %13 = vector.shape_cast %12 : vector<4xf32> to vector<4x1xf32>
    %14 = vector.broadcast %13 : vector<4x1xf32> to vector<4x10xf32>
    %15 = arith.subf %10, %14 : vector<4x10xf32>
    %16 = math.exp %15 : vector<4x10xf32>
    %cst_10 = arith.constant dense<0.000000e+00> : vector<4xf32>
    %17 = vector.multi_reduction <add>, %16, %cst_10 [1] : vector<4x10xf32> to vector<4xf32>
    %18 = vector.shape_cast %17 : vector<4xf32> to vector<4x1xf32>
    %19 = math.log %18 : vector<4x1xf32>
    %20 = arith.addf %13, %19 : vector<4x1xf32>
    %21 = tpu.iota {dimensions = array<i32: 1>} : vector<4x10xi32>
    %22 = vector.broadcast %11 : vector<4x1xi32> to vector<4x10xi32>
    %23 = arith.cmpi eq, %21, %22 : vector<4x10xi32>
    %cst_11 = arith.constant 0.000000e+00 : f32
    %24 = vector.broadcast %cst_11 : f32 to vector<4x10xf32>
    %25 = arith.select %23, %10, %24 : vector<4x10xi1>, vector<4x10xf32>
    %cst_12 = arith.constant dense<0.000000e+00> : vector<4xf32>
    %26 = vector.multi_reduction <add>, %25, %cst_12 [1] : vector<4x10xf32> to vector<4xf32>
    %27 = vector.shape_cast %26 : vector<4xf32> to vector<4x1xf32>
    %28 = arith.subf %20, %27 : vector<4x1xf32>
    %29 = vector.extract_strided_slice %8 {offsets = [0, 10], sizes = [4, 10], strides = [1, 1]} : vector<4x20xf32> to vector<4x10xf32>
    %30 = vector.extract_strided_slice %9 {offsets = [0, 1], sizes = [4, 1], strides = [1, 1]} : vector<4x2xi32> to vector<4x1xi32>
    %cst_13 = arith.constant dense<0xFF800000> : vector<4xf32>
    %31 = vector.multi_reduction <maximumf>, %29, %cst_13 [1] : vector<4x10xf32> to vector<4xf32>
    %32 = vector.shape_cast %31 : vector<4xf32> to vector<4x1xf32>
    %33 = vector.broadcast %32 : vector<4x1xf32> to vector<4x10xf32>
    %34 = arith.subf %29, %33 : vector<4x10xf32>
    %35 = math.exp %34 : vector<4x10xf32>
    %cst_14 = arith.constant dense<0.000000e+00> : vector<4xf32>
    %36 = vector.multi_reduction <add>, %35, %cst_14 [1] : vector<4x10xf32> to vector<4xf32>
    %37 = vector.shape_cast %36 : vector<4xf32> to vector<4x1xf32>
    %38 = math.log %37 : vector<4x1xf32>
    %39 = arith.addf %32, %38 : vector<4x1xf32>
    %40 = tpu.iota {dimensions = array<i32: 1>} : vector<4x10xi32>
    %41 = vector.broadcast %30 : vector<4x1xi32> to vector<4x10xi32>
    %42 = arith.cmpi eq, %40, %41 : vector<4x10xi32>
    %cst_15 = arith.constant 0.000000e+00 : f32
    %43 = vector.broadcast %cst_15 : f32 to vector<4x10xf32>
    %44 = arith.select %42, %29, %43 : vector<4x10xi1>, vector<4x10xf32>
    %cst_16 = arith.constant dense<0.000000e+00> : vector<4xf32>
    %45 = vector.multi_reduction <add>, %44, %cst_16 [1] : vector<4x10xf32> to vector<4xf32>
    %46 = vector.shape_cast %45 : vector<4xf32> to vector<4x1xf32>
    %47 = arith.subf %39, %46 : vector<4x1xf32>
    %48 = vector.broadcast %28 : vector<4x1xf32> to vector<4x2xf32>
    %49 = vector.broadcast %2 : vector<1x2xf32> to vector<4x2xf32>
    %50 = arith.mulf %48, %49 : vector<4x2xf32>
    %51 = vector.broadcast %47 : vector<4x1xf32> to vector<4x2xf32>
    %52 = vector.broadcast %3 : vector<1x2xf32> to vector<4x2xf32>
    %53 = arith.mulf %51, %52 : vector<4x2xf32>
    %54 = arith.addf %50, %53 : vector<4x2xf32>
    %55 = vector.broadcast %4 : vector<1x2xf32> to vector<4x2xf32>
    %56 = arith.addf %54, %55 : vector<4x2xf32>
    %c0_17 = arith.constant 0 : index
    %c0_18 = arith.constant 0 : index
    %57 = vector.load %arg4[%c0_17, %c0_18] : memref<4x2xf32, #tpu.memory_space<vmem>>, vector<4x2xf32>
    tpu.vector_store %arg4[%c0_17, %c0_18], %56 {strides = array<i32>} : memref<4x2xf32, #tpu.memory_space<vmem>>, vector<4x2xf32>,
    return
  }
  func.func @transform_0(%arg0: i32) -> (i32, i32) {
    %c0_i32 = arith.constant 0 : i32
    %c0_i32_0 = arith.constant 0 : i32
    return %arg0, %c0_i32 : i32, i32
  }
  func.func @transform_1(%arg0: i32) -> (i32, i32) {
    %c0_i32 = arith.constant 0 : i32
    %c0_i32_0 = arith.constant 0 : i32
    return %arg0, %c0_i32 : i32, i32
  }
  func.func @transform_2(%arg0: i32) -> (i32, i32) {
    %c0_i32 = arith.constant 0 : i32
    %c0_i32_0 = arith.constant 0 : i32
    %c0_i32_1 = arith.constant 0 : i32
    return %c0_i32, %c0_i32_0 : i32, i32
  }
  func.func @transform_3(%arg0: i32) -> (i32, i32) {
    %c0_i32 = arith.constant 0 : i32
    %c0_i32_0 = arith.constant 0 : i32
    return %arg0, %c0_i32 : i32, i32
  }
}

</mosaic_0001>

<llo_original>
// kernel: tpu_custom_call.1
$region0: #{tpu_custom_call.1}
  #allocation0 [shape = 'u32[]', space=smem, size = 0x4, offset = 0x4, fixed_abs, tag = 'smem constant byte address 0x4 - core index']
  #allocation1 [shape = 'u32[144,128]{1,0:T(1,128)}', space=vmem, size = 0x12000, scoped, tag = 'internal scratch']
  %s0 = inlined_call_operand.vmem [shape: f32[4,20], index: 0, kind: input, shape index: {}]
  %s1 = inlined_call_operand.vmem [shape: s32[4,2], index: 1, kind: input, shape index: {}]
  %s2 = inlined_call_operand.hbm [shape: f32[24,20], index: 2, kind: input, shape index: {}]
  %s3 = inlined_call_operand.vmem [shape: f32[4,2], index: 3, kind: output, shape index: {}]
  %s4 = sld [smem:[#allocation0]]
  $region26: #{tpu_custom_call.1} parent=0
    _
  %s6 = ssub.s32 1, %s4
  %s7 = scalar_select 0, %s6, %s4
  $region1: #{tpu_custom_call.1} parent=0
    #allocation2 [shape = 'u8[12288]{0}', space=vmem, size = 0x3000, scoped, tag = 'input window, operand 2, single buffered']
    #allocation3 [shape = 's32[1]{0}', space=sflag, size = 0x4, scoped, tag = 'scoped memory for tpu_custom_call.1']
    %8 = vsyncpa [#allocation3], 0
    // Predicated region
    $region2: #{tpu_custom_call.1} parent=1 // pred_check
      _
    $region3: #{tpu_custom_call.1} parent=1 // pred_check_branch
      %10 = sbr.rel (0) target = $region5
    $region4: #{tpu_custom_call.1} parent=1 // pred_region
      _
    $region5: #{tpu_custom_call.1} parent=1 // pred_fallthru
      _
    // Predicated region
    $region6: #{tpu_custom_call.1} parent=1 // pred_check
      _
    $region7: #{tpu_custom_call.1} parent=1 // pred_check_branch
      %12 = sbr.rel (0) target = $region9
    $region8: #{tpu_custom_call.1} parent=1 // pred_region
      _
    $region9: #{tpu_custom_call.1} parent=1 // pred_fallthru
      _
    // Predicated region
    $region10: #{tpu_custom_call.1} parent=1 // pred_check
      _
    $region11: #{tpu_custom_call.1} parent=1 // pred_check_branch
      %14 = sbr.rel (0) target = $region13
    $region12: #{tpu_custom_call.1} parent=1 // pred_region
      %s16 = ssub.s32 384, 384
      %17 = vsyncadd [#allocation3], %s16
      %s18 = sshll.u32 [#allocation2], 4
      %s19 = int_to_ptr.vmem [resolvable:$true] %s18
      %24 = dma.hbm_to_vmem [thread:$0]  %s2, 384, %s19, [#allocation3], 128, 128, 8
    $region13: #{tpu_custom_call.1} parent=1 // pred_fallthru
      _
    // Predicated region
    $region14: #{tpu_custom_call.1} parent=1 // pred_check
      _
    $region15: #{tpu_custom_call.1} parent=1 // pred_check_branch
      %26 = sbr.rel (0) target = $region17
    $region16: #{tpu_custom_call.1} parent=1 // pred_region
      %27 = dma.done [#allocation3], 384
    $region17: #{tpu_custom_call.1} parent=1 // pred_fallthru
      _
    %v28 = vld [vmem:[#allocation2] sm:$0xff]
    %v29 = vld [vmem:[#allocation2 + $0x8] sm:$0xff]
    %v30 = vld [vmem:[#allocation2 + $0x10] sm:$0xf]
    %v31 = vld [vmem:[#allocation2 + $0x14] sm:$0x1]
    %v32 = vld [vmem:[#allocation2 + $0x15] sm:$0x1]
    %v33 = vld [vmem:[#allocation2 + $0x16] sm:$0x1]
    %v34 = vld [vmem:[#allocation2 + $0x17] sm:$0x1]
    %v35 = vld [vmem:[%s0] sm:$0xf]
    %v36 = vlaneseq
    %v37 = vshrl.u32 %v36, 7
    %v38 = vsub.s32 0, %v37
    %v39 = vrot.slane %v31, %v38
    %vm40 = vcmask 162816
    %v42 = vsel %vm40, %v35, 0
    %vm44 = vcmask 1043456
    %v46 = vsel %vm44, %v30, 0
    %48 = vmatprep.subr.mxu0 0.0
    %49 = vmatpush1.msra.mxu0 %v28
    %50 = vmatprep.subr.mxu0 0.0
    %51 = vmatpush1.msra.mxu0 %v29
    %52 = vmatprep.subr.mxu0 0.0
    %53 = vmatpush1.msra.mxu0 %v46
    %54 = vmatprep.subr.mxu0 0.0
    %55 = vmatpush1.msra.mxu0 0.0
    %56 = vmatprep.subr.mxu0 0.0
    %57 = vmatpush1.msra.mxu0 0.0
    %58 = vmatprep.subr.mxu0 0.0
    %59 = vmatpush1.msra.mxu0 0.0
    %60 = vmatprep.subr.mxu0 0.0
    %61 = vmatpush1.msra.mxu0 0.0
    %62 = vmatprep.subr.mxu0 0.0
    %63 = vmatpush1.msra.mxu0 0.0
    %64 = vmatprep.subr.mxu0 0.0
    %65 = vmatpush1.msra.mxu0 0.0
    %66 = vmatprep.subr.mxu0 0.0
    %67 = vmatpush1.msra.mxu0 0.0
    %68 = vmatprep.subr.mxu0 0.0
    %69 = vmatpush1.msra.mxu0 0.0
    %70 = vmatprep.subr.mxu0 0.0
    %71 = vmatpush1.msra.mxu0 0.0
    %72 = vmatprep.subr.mxu0 0.0
    %73 = vmatpush1.msra.mxu0 0.0
    %74 = vmatprep.subr.mxu0 0.0
    %75 = vmatpush1.msra.mxu0 0.0
    %76 = vmatprep.subr.mxu0 0.0
    %77 = vmatpush1.msra.mxu0 0.0
    %78 = vmatprep.subr.mxu0 0.0
    %79 = vmatpush1.msra.mxu0 0.0
    %80 = vmatprep.subr.mxu0 0.0
    %81 = vmatpush1.msra.mxu0 0.0
    %82 = vmatprep.subr.mxu0 0.0
    %83 = vmatpush1.msra.mxu0 0.0
    %84 = vmatprep.subr.mxu0 0.0
    %85 = vmatpush1.msra.mxu0 0.0
    %86 = vmatprep.subr.mxu0 0.0
    %87 = vmatpush1.msra.mxu0 0.0
    %88 = vmatprep.subr.mxu0 0.0
    %89 = vmatpush1.msra.mxu0 0.0
    %90 = vmatprep.subr.mxu0 0.0
    %91 = vmatpush1.msra.mxu0 0.0
    %92 = vmatprep.subr.mxu0 0.0
    %93 = vmatpush1.msra.mxu0 0.0
    %94 = vmatprep.subr.mxu0 0.0
    %95 = vmatpush1.msra.mxu0 0.0
    %96 = vmatprep.subr.mxu0 0.0
    %97 = vmatpush1.msra.mxu0 0.0
    %98 = vmatprep.subr.mxu0 0.0
    %99 = vmatpush1.msra.mxu0 0.0
    %100 = vmatprep.subr.mxu0 0.0
    %101 = vmatpush1.msra.mxu0 0.0
    %102 = vmatprep.subr.mxu0 0.0
    %103 = vmatpush1.msra.mxu0 0.0
    %104 = vmatprep.subr.mxu0 0.0
    %105 = vmatpush1.msra.mxu0 0.0
    %106 = vmatprep.subr.mxu0 0.0
    %107 = vmatpush1.msra.mxu0 0.0
    %108 = vmatprep.subr.mxu0 0.0
    %109 = vmatpush1.msra.mxu0 0.0
    %110 = vmatprep.subr.mxu0 0.0
    %111 = vmatpush1.msra.mxu0 0.0
    %112 = vmatprep.mubr.f32.mxu0 0.0
    %113 = vmatmul.mubr.f32.gmra.mrb[0].mxu0 %v42
    %v114 = vpop.f32.mrb[0].mxu0
    %v115 = vadd.f32 %v39, %v114
    %v116 = vpop.f32.mrb[0].mxu0
    %117 = vdwg.mxu0
    %v118 = vld [vmem:[%s1] sm:$0xf]
    %vm119 = vcmask 76800
    %v120 = vsel %vm119, %v115, -inf
    %121 = vmax.xlane.f32.xlu0 %v120
    %v122 = vpop.xlane.xlu0 %121
    %v123 = vsub.f32 %v115, %v122
    %v124 = vmul.f32 %v123, 1.442695
    %v125 = vpow.pop %v124
    %v126 = vsel %vm119, %v125, 0.0
    %127 = vadd.xlane.f32.xlu0 %v126
    %v128 = vpop.xlane.xlu0 %127
    %v129 = vlog2.pop %v128
    %v130 = vmul.f32 %v129, 0.6931472
    %v131 = vadd.f32 %v122, %v130
    %v132 = vlaneseq
    %v133 = vand.u32 %v132, 127
    %134 = vset.pattern.permute.xlu0 0
    %135 = vperm.xlu0 %134, %v118
    %v136 = vpop.permute.xlu0 %135
    %vm137 = vcmp.eq.s32.totalorder %v133, %v136
    %v138 = vsel %vm137, %v115, 0.0
    %v139 = vsel %vm119, %v138, 0.0
    %140 = vadd.xlane.f32.xlu0 %v139
    %v141 = vpop.xlane.xlu0 %140
    %v142 = vsub.f32 %v131, %v141
    %vm143 = vcmask 158800
    %v144 = vsel %vm143, %v115, -inf
    %145 = vmax.xlane.f32.xlu0 %v144
    %v146 = vpop.xlane.xlu0 %145
    %v147 = vsub.f32 %v115, %v146
    %v148 = vmul.f32 %v147, 1.442695
    %v149 = vpow.pop %v148
    %151 = vrot.lane.b32.xlu0 %v149, 118
    %v152 = vpop.permute.xlu0 %151
    %v154 = vsel %vm119, %v152, 0.0
    %155 = vadd.xlane.f32.xlu0 %v154
    %v156 = vpop.xlane.xlu0 %155
    %v157 = vlog2.pop %v156
    %v158 = vmul.f32 %v157, 0.6931472
    %v159 = vadd.f32 %v146, %v158
    %160 = vset.pattern.permute.xlu0 1
    %161 = vperm.xlu0 %160, %v118
    %v162 = vpop.permute.xlu0 %161
    %vm163 = vcmp.eq.s32.totalorder %v133, %v162
    %165 = vrot.lane.b32.xlu0 %v115, 118
    %v166 = vpop.permute.xlu0 %165
    %v168 = vsel %vm163, %v166, 0.0
    %v169 = vsel %vm119, %v168, 0.0
    %170 = vadd.xlane.f32.xlu0 %v169
    %v171 = vpop.xlane.xlu0 %170
    %v172 = vsub.f32 %v159, %v171
    %v173 = vlaneseq
    %v174 = vshrl.u32 %v173, 7
    %v175 = vsub.s32 0, %v174
    %v176 = vrot.slane %v32, %v175
    %v177 = vmul.f32 %v142, %v176
    %v178 = vlaneseq
    %v179 = vshrl.u32 %v178, 7
    %v180 = vsub.s32 0, %v179
    %v181 = vrot.slane %v33, %v180
    %v182 = vmul.f32 %v172, %v181
    %v183 = vadd.f32 %v177, %v182
    %v184 = vlaneseq
    %v185 = vshrl.u32 %v184, 7
    %v186 = vsub.s32 0, %v185
    %v187 = vrot.slane %v34, %v186
    %v188 = vadd.f32 %v183, %v187
    %vm189 = vcmask 11264
    %190 = vst.msk [vmem:[%s3] sm:$0xf] %vm189, %v188
    // Predicated region
    $region18: #{tpu_custom_call.1} parent=1 // pred_check
      _
    $region19: #{tpu_custom_call.1} parent=1 // pred_check_branch
      %192 = sbr.rel (0) target = $region21
    $region20: #{tpu_custom_call.1} parent=1 // pred_region
      _
    $region21: #{tpu_custom_call.1} parent=1 // pred_fallthru
      _
    // Predicated region
    $region22: #{tpu_custom_call.1} parent=1 // pred_check
      _
    $region23: #{tpu_custom_call.1} parent=1 // pred_check_branch
      %194 = sbr.rel (0) target = $region25
    $region24: #{tpu_custom_call.1} parent=1 // pred_region
      _
    $region25: #{tpu_custom_call.1} parent=1 // pred_fallthru
      _
    %195 = vsyncpa [#allocation3], 1

</llo_original>
